<compile_context>
chip_gen: v6e
topology: v6e:2x2x1
jax: 0.10.0
libtpu: 0.0.40
codegen_flags: <defaults>
</compile_context>

<pallas_src>
import functools

import jax
import jax.numpy as jnp
from jax.experimental import pallas as pl
from jax.experimental.pallas import tpu as pltpu


def _sigmoid(x, approx):
    if approx:
        # EUP exp + EUP approx reciprocal (both off the VALU critical path).
        return pl.reciprocal(1.0 + jnp.exp(-x), approx=True)
    return jax.nn.sigmoid(x)


def mlp_sigmoid_kernel(x_ref, w1_ref, b1_ref, w2_ref, b2_ref, o_ref, *, approx):
    # Cast x to the MXU dtype inside the kernel (no wrapper-side cast/pad pass).
    x = x_ref[...].astype(w1_ref.dtype)
    # hidden = sigmoid(x @ W1 + b1): MXU matmul, f32 accumulation, f32 activation.
    h = jnp.dot(x, w1_ref[...], preferred_element_type=jnp.float32)
    h = _sigmoid(h + b1_ref[...], approx)                       # (block_m, hid) f32
    # out = sigmoid(h @ W2 + b2): cast activation to MXU dtype, accumulate f32.
    y = jnp.dot(h.astype(w2_ref.dtype), w2_ref[...],
                preferred_element_type=jnp.float32)
    o_ref[...] = _sigmoid(y + b2_ref[...], approx).astype(o_ref.dtype)


def _round_up(n: int, m: int) -> int:
    return ((n + m - 1) // m) * m


def _detect_num_tensorcores() -> int:
    # Best-effort: v7x has 2 TensorCores per chip, v5e/v6e have 1.
    try:
        d = jax.devices()[0]
        n = getattr(d, "num_cores", None)
        if n:
            return max(1, int(n))
        kind = str(getattr(d, "device_kind", "")).lower()
        return 2 if "v7" in kind else 1
    except Exception:
        return 1


def _pick_block_m(batch: int, *, cap: int = 512, num_cores: int = 1) -> int:
    """Big tiles on single-TC chips; evenly balanced tiles across TCs on v7x."""
    b8 = _round_up(max(batch, 1), 8)
    if num_cores <= 1 or b8 <= 64:
        return min(b8, cap)
    # Smallest k (tiles per core) such that the per-tile size respects the cap,
    # then split the batch evenly over num_cores * k tiles.
    k = 1
    while _round_up(-(-batch // (num_cores * k)), 8) > cap:
        k += 1
    return _round_up(-(-batch // (num_cores * k)), 8)


def prepare_params(w1, b1, w2, b2, *, mxu_dtype=jnp.bfloat16):
    """One-time parameter prep (hoisted out of the per-call hot path).

    w1: (in, hid), b1: (hid,), w2: (hid, out), b2: (out,)  [transposed vs nn.Linear]
    Weights are stored in the MXU dtype; biases stay f32 (VPU/EUP path is f32).
    """
    return (w1.astype(mxu_dtype),
            b1.reshape(1, -1).astype(jnp.float32),
            w2.astype(mxu_dtype),
            b2.reshape(1, -1).astype(jnp.float32))


def neural_network_forward(x, params, *, block_m=None, num_cores=None,
                           approx_sigmoid=None, single_buffer_weights=True):
    """forward(x) = sigmoid(sigmoid(x @ W1 + b1) @ W2 + b2), one pallas_call.

    x: (B, in) unpadded; params from prepare_params(); returns (B, out) in x.dtype.
    """
    w1_p, b1_p, w2_p, b2_p = params
    B, in_dim = x.shape
    hid = w1_p.shape[1]
    out_dim = w2_p.shape[1]
    out_dtype = x.dtype

    if num_cores is None:
        num_cores = _detect_num_tensorcores()
    if block_m is None:
        block_m = _pick_block_m(B, num_cores=num_cores)
    block_m = max(8, _round_up(block_m, 8))
    n_blocks = pl.cdiv(B, block_m)

    if approx_sigmoid is None:
        # Exact sigmoid on the f32 parity path; approx-EUP reciprocal otherwise.
        approx_sigmoid = (jnp.dtype(w1_p.dtype) != jnp.dtype(jnp.float32))
    kernel = functools.partial(mlp_sigmoid_kernel, approx=approx_sigmoid)

    x_item = jnp.dtype(x.dtype).itemsize
    o_item = jnp.dtype(out_dtype).itemsize
    w_bytes = sum(int(a.size) * jnp.dtype(a.dtype).itemsize
                  for a in (w1_p, b1_p, w2_p, b2_p))

    # Advisory cost hint so XLA schedules this (overhead-bound) custom call well.
    cost = pl.CostEstimate(
        flops=2 * B * (in_dim * hid + hid * out_dim),
        transcendentals=2 * B * (hid + out_dim),          # exp + reciprocal per elem
        bytes_accessed=(B * in_dim * x_item + w_bytes + B * out_dim * o_item),
    )

    def weight_spec(shape, single_buffer):
        zero = lambda i, _shape=shape: (0,) * len(_shape)
        if single_buffer:
            # Grid-constant blocks (index_map always 0): no second buffer needed.
            return pl.BlockSpec(shape, zero, pipeline_mode=pl.Buffered(1))
        return pl.BlockSpec(shape, zero)

    def run(single_buffer):
        tile_bytes = (2 * block_m * in_dim * x_item                    # x (2 bufs)
                      + 2 * block_m * out_dim * o_item                 # out (2 bufs)
                      + (1 if single_buffer else 2) * w_bytes          # weights/biases
                      + 3 * block_m * max(hid, out_dim) * 4)           # f32 temps
        vmem_limit = int(min(max(4 * tile_bytes, 4 << 20), 32 << 20))  # tight budget

        return pl.pallas_call(
            kernel,
            out_shape=jax.ShapeDtypeStruct((B, out_dim), out_dtype),   # true width
            grid_spec=pltpu.PrefetchScalarGridSpec(
                num_scalar_prefetch=0,
                grid=(n_blocks,),
                in_specs=[
                    pl.BlockSpec((block_m, in_dim), lambda i: (i, 0)),  # x tile
                    weight_spec((in_dim, hid), single_buffer),          # W1
                    weight_spec((1, hid), single_buffer),               # b1
                    weight_spec((hid, out_dim), single_buffer),         # W2
                    weight_spec((1, out_dim), single_buffer),           # b2
                ],
                out_specs=pl.BlockSpec((block_m, out_dim), lambda i: (i, 0)),
            ),
            compiler_params=pltpu.CompilerParams(
                dimension_semantics=("parallel",),   # batch tiles shard over TCs (v7x)
                vmem_limit_bytes=vmem_limit,
            ),
            cost_estimate=cost,
        )(x, w1_p, b1_p, w2_p, b2_p)

    if single_buffer_weights:
        try:
            return run(True)
        except Exception:
            # Pallas build without single-buffer pipeline_mode support: fall back.
            return run(False)
    return run(False)


if __name__ == "__main__":
    # NeuralNetwork(input_size=16, hidden_size=32, output_size=8), batch=8.
    batch, input_size, hidden_size, output_size = 8, 16, 32, 8

    key = jax.random.PRNGKey(0)
    kx, kw1, kb1, kw2, kb2, kxb = jax.random.split(key, 6)

    x = jax.random.normal(kx, (batch, input_size), dtype=jnp.float32)
    # Deterministic init mimicking nn.Linear's uniform(-1/sqrt(fan_in), 1/sqrt(fan_in)).
    lim1 = 1.0 / (input_size ** 0.5)
    lim2 = 1.0 / (hidden_size ** 0.5)
    w1 = jax.random.uniform(kw1, (input_size, hidden_size), jnp.float32, -lim1, lim1)
    b1 = jax.random.uniform(kb1, (hidden_size,), jnp.float32, -lim1, lim1)
    w2 = jax.random.uniform(kw2, (hidden_size, output_size), jnp.float32, -lim2, lim2)
    b2 = jax.random.uniform(kb2, (output_size,), jnp.float32, -lim2, lim2)

    def ref_fn(xv):
        return jax.nn.sigmoid(jax.nn.sigmoid(xv @ w1 + b1) @ w2 + b2)

    # Parameter prep is done ONCE here (hoisted out of the forward hot path).
    params_f32 = prepare_params(w1, b1, w2, b2, mxu_dtype=jnp.float32)
    params_bf16 = prepare_params(w1, b1, w2, b2, mxu_dtype=jnp.bfloat16)
    jax.block_until_ready(params_f32)
    jax.block_until_ready(params_bf16)

    # 1) exact-f32 MXU path + exact sigmoid (PyTorch-parity semantics).
    out_f32 = jax.block_until_ready(neural_network_forward(x, params_f32))
    assert out_f32.shape == (batch, output_size)
    assert jnp.allclose(out_f32, ref_fn(x), atol=1e-5, rtol=1e-5)

    # 2) default fast path: bf16 MXU operands, f32 accumulation, approx-EUP sigmoid.
    out_bf16 = jax.block_until_ready(neural_network_forward(x, params_bf16))
    assert jnp.allclose(out_bf16, ref_fn(x), atol=2e-2, rtol=2e-2)

    # 3) stacked / large ragged batch (500): ONE kernel launch, unpadded x and output,
    #    TC-balanced block_m, partial last tile handled by the grid (no wrapper pad).
    xb = jax.random.normal(kxb, (500, input_size), dtype=jnp.float32)
    out_big = jax.block_until_ready(neural_network_forward(xb, params_bf16))
    assert out_big.shape == (500, output_size)
    assert jnp.allclose(out_big, ref_fn(xb), atol=2e-2, rtol=2e-2)

    print("KERNEL_OK")
</pallas_src>

<mosaic_0001>
module attributes {stable_mosaic.version = 11 : i64} {
  func.func @mlp_sigmoid_kernel(%arg0: i32, %arg1: memref<8x16xf32, #tpu.memory_space<vmem>>, %arg2: memref<16x32xf32, #tpu.memory_space<vmem>>, %arg3: memref<1x32xf32, #tpu.memory_space<vmem>>, %arg4: memref<32x8xf32, #tpu.memory_space<vmem>>, %arg5: memref<1x8xf32, #tpu.memory_space<vmem>>, %arg6: memref<8x8xf32, #tpu.memory_space<vmem>>) attributes {dimension_semantics = [#tpu.dimension_semantics<parallel>], iteration_bounds = array<i64: 1>, scalar_prefetch = 0 : i64, scratch_operands = 0 : i64, tpu.core_type = #tpu.core_type<tc>, window_params = [{transform_indices = @transform_0, window_bounds = array<i64: 8, 16>}, {pipeline_mode = #tpu.pipeline_mode<synchronous>, transform_indices = @transform_1, window_bounds = array<i64: 16, 32>}, {pipeline_mode = #tpu.pipeline_mode<synchronous>, transform_indices = @transform_2, window_bounds = array<i64: 1, 32>}, {pipeline_mode = #tpu.pipeline_mode<synchronous>, transform_indices = @transform_3, window_bounds = array<i64: 32, 8>}, {pipeline_mode = #tpu.pipeline_mode<synchronous>, transform_indices = @transform_4, window_bounds = array<i64: 1, 8>}, {transform_indices = @transform_5, window_bounds = array<i64: 8, 8>}]} {
    %c0 = arith.constant 0 : index
    %c0_0 = arith.constant 0 : index
    %0 = vector.load %arg1[%c0, %c0_0] : memref<8x16xf32, #tpu.memory_space<vmem>>, vector<8x16xf32>
    %c0_1 = arith.constant 0 : index
    %c0_2 = arith.constant 0 : index
    %1 = vector.load %arg2[%c0_1, %c0_2] : memref<16x32xf32, #tpu.memory_space<vmem>>, vector<16x32xf32>
    %cst = arith.constant dense<0.000000e+00> : vector<8x32xf32>
    %2 = tpu.matmul %0, %1, %cst {dimension_numbers = #tpu.dot_dimension_numbers<[1], [0], [0], [1], [0, 0, 1, 1], [], []>} : vector<8x16xf32>, vector<16x32xf32>, vector<8x32xf32> -> vector<8x32xf32>
    %c0_3 = arith.constant 0 : index
    %c0_4 = arith.constant 0 : index
    %3 = vector.load %arg3[%c0_3, %c0_4] : memref<1x32xf32, #tpu.memory_space<vmem>>, vector<1x32xf32>
    %4 = vector.broadcast %3 : vector<1x32xf32> to vector<8x32xf32>
    %5 = arith.addf %2, %4 : vector<8x32xf32>
    %6 = arith.negf %5 : vector<8x32xf32>
    %7 = math.exp %6 : vector<8x32xf32>
    %cst_5 = arith.constant 1.000000e+00 : f32
    %8 = vector.broadcast %cst_5 : f32 to vector<8x32xf32>
    %9 = arith.addf %8, %7 : vector<8x32xf32>
    %10 = arith.divf %8, %9 : vector<8x32xf32>
    %c0_6 = arith.constant 0 : index
    %c0_7 = arith.constant 0 : index
    %11 = vector.load %arg4[%c0_6, %c0_7] : memref<32x8xf32, #tpu.memory_space<vmem>>, vector<32x8xf32>
    %cst_8 = arith.constant dense<0.000000e+00> : vector<8x8xf32>
    %12 = tpu.matmul %10, %11, %cst_8 {dimension_numbers = #tpu.dot_dimension_numbers<[1], [0], [0], [1], [0, 0, 1, 1], [], []>} : vector<8x32xf32>, vector<32x8xf32>, vector<8x8xf32> -> vector<8x8xf32>
    %c0_9 = arith.constant 0 : index
    %c0_10 = arith.constant 0 : index
    %13 = vector.load %arg5[%c0_9, %c0_10] : memref<1x8xf32, #tpu.memory_space<vmem>>, vector<1x8xf32>
    %14 = vector.broadcast %13 : vector<1x8xf32> to vector<8x8xf32>
    %15 = arith.addf %12, %14 : vector<8x8xf32>
    %16 = arith.negf %15 : vector<8x8xf32>
    %17 = math.exp %16 : vector<8x8xf32>
    %cst_11 = arith.constant 1.000000e+00 : f32
    %18 = vector.broadcast %cst_11 : f32 to vector<8x8xf32>
    %19 = arith.addf %18, %17 : vector<8x8xf32>
    %20 = arith.divf %18, %19 : vector<8x8xf32>
    %c0_12 = arith.constant 0 : index
    %c0_13 = arith.constant 0 : index
    %21 = vector.load %arg6[%c0_12, %c0_13] : memref<8x8xf32, #tpu.memory_space<vmem>>, vector<8x8xf32>
    tpu.vector_store %arg6[%c0_12, %c0_13], %20 {strides = array<i32>} : memref<8x8xf32, #tpu.memory_space<vmem>>, vector<8x8xf32>,
    return
  }
  func.func @transform_0(%arg0: i32) -> (i32, i32) {
    %c0_i32 = arith.constant 0 : i32
    %c0_i32_0 = arith.constant 0 : i32
    return %arg0, %c0_i32 : i32, i32
  }
  func.func @transform_1(%arg0: i32) -> (i32, i32) {
    %c0_i32 = arith.constant 0 : i32
    %c0_i32_0 = arith.constant 0 : i32
    %c0_i32_1 = arith.constant 0 : i32
    return %c0_i32, %c0_i32_0 : i32, i32
  }
  func.func @transform_2(%arg0: i32) -> (i32, i32) {
    %c0_i32 = arith.constant 0 : i32
    %c0_i32_0 = arith.constant 0 : i32
    %c0_i32_1 = arith.constant 0 : i32
    return %c0_i32, %c0_i32_0 : i32, i32
  }
  func.func @transform_3(%arg0: i32) -> (i32, i32) {
    %c0_i32 = arith.constant 0 : i32
    %c0_i32_0 = arith.constant 0 : i32
    %c0_i32_1 = arith.constant 0 : i32
    return %c0_i32, %c0_i32_0 : i32, i32
  }
  func.func @transform_4(%arg0: i32) -> (i32, i32) {
    %c0_i32 = arith.constant 0 : i32
    %c0_i32_0 = arith.constant 0 : i32
    %c0_i32_1 = arith.constant 0 : i32
    return %c0_i32, %c0_i32_0 : i32, i32
  }
  func.func @transform_5(%arg0: i32) -> (i32, i32) {
    %c0_i32 = arith.constant 0 : i32
    %c0_i32_0 = arith.constant 0 : i32
    return %arg0, %c0_i32 : i32, i32
  }
}

module attributes {stable_mosaic.version = 11 : i64} {
  func.func @mlp_sigmoid_kernel(%arg0: i32, %arg1: memref<8x16xf32, #tpu.memory_space<vmem>>, %arg2: memref<16x32xf32, #tpu.memory_space<vmem>>, %arg3: memref<1x32xf32, #tpu.memory_space<vmem>>, %arg4: memref<32x8xf32, #tpu.memory_space<vmem>>, %arg5: memref<1x8xf32, #tpu.memory_space<vmem>>, %arg6: memref<8x8xf32, #tpu.memory_space<vmem>>) attributes {dimension_semantics = [#tpu.dimension_semantics<parallel>], iteration_bounds = array<i64: 1>, scalar_prefetch = 0 : i64, scratch_operands = 0 : i64, tpu.core_type = #tpu.core_type<tc>, window_params = [{transform_indices = @transform_0, window_bounds = array<i64: 8, 16>}, {pipeline_mode = #tpu.pipeline_mode<synchronous>, transform_indices = @transform_1, window_bounds = array<i64: 16, 32>}, {pipeline_mode = #tpu.pipeline_mode<synchronous>, transform_indices = @transform_2, window_bounds = array<i64: 1, 32>}, {pipeline_mode = #tpu.pipeline_mode<synchronous>, transform_indices = @transform_3, window_bounds = array<i64: 32, 8>}, {pipeline_mode = #tpu.pipeline_mode<synchronous>, transform_indices = @transform_4, window_bounds = array<i64: 1, 8>}, {transform_indices = @transform_5, window_bounds = array<i64: 8, 8>}]} {
    %c0 = arith.constant 0 : index
    %c0_0 = arith.constant 0 : index
    %0 = vector.load %arg1[%c0, %c0_0] : memref<8x16xf32, #tpu.memory_space<vmem>>, vector<8x16xf32>
    %c0_1 = arith.constant 0 : index
    %c0_2 = arith.constant 0 : index
    %1 = vector.load %arg2[%c0_1, %c0_2] : memref<16x32xf32, #tpu.memory_space<vmem>>, vector<16x32xf32>
    %cst = arith.constant dense<0.000000e+00> : vector<8x32xf32>
    %2 = tpu.matmul %0, %1, %cst {dimension_numbers = #tpu.dot_dimension_numbers<[1], [0], [0], [1], [0, 0, 1, 1], [], []>} : vector<8x16xf32>, vector<16x32xf32>, vector<8x32xf32> -> vector<8x32xf32>
    %c0_3 = arith.constant 0 : index
    %c0_4 = arith.constant 0 : index
    %3 = vector.load %arg3[%c0_3, %c0_4] : memref<1x32xf32, #tpu.memory_space<vmem>>, vector<1x32xf32>
    %4 = vector.broadcast %3 : vector<1x32xf32> to vector<8x32xf32>
    %5 = arith.addf %2, %4 : vector<8x32xf32>
    %6 = arith.negf %5 : vector<8x32xf32>
    %7 = math.exp %6 : vector<8x32xf32>
    %cst_5 = arith.constant 1.000000e+00 : f32
    %8 = vector.broadcast %cst_5 : f32 to vector<8x32xf32>
    %9 = arith.addf %8, %7 : vector<8x32xf32>
    %10 = arith.divf %8, %9 : vector<8x32xf32>
    %c0_6 = arith.constant 0 : index
    %c0_7 = arith.constant 0 : index
    %11 = vector.load %arg4[%c0_6, %c0_7] : memref<32x8xf32, #tpu.memory_space<vmem>>, vector<32x8xf32>
    %cst_8 = arith.constant dense<0.000000e+00> : vector<8x8xf32>
    %12 = tpu.matmul %10, %11, %cst_8 {dimension_numbers = #tpu.dot_dimension_numbers<[1], [0], [0], [1], [0, 0, 1, 1], [], []>} : vector<8x32xf32>, vector<32x8xf32>, vector<8x8xf32> -> vector<8x8xf32>
    %c0_9 = arith.constant 0 : index
    %c0_10 = arith.constant 0 : index
    %13 = vector.load %arg5[%c0_9, %c0_10] : memref<1x8xf32, #tpu.memory_space<vmem>>, vector<1x8xf32>
    %14 = vector.broadcast %13 : vector<1x8xf32> to vector<8x8xf32>
    %15 = arith.addf %12, %14 : vector<8x8xf32>
    %16 = arith.negf %15 : vector<8x8xf32>
    %17 = math.exp %16 : vector<8x8xf32>
    %cst_11 = arith.constant 1.000000e+00 : f32
    %18 = vector.broadcast %cst_11 : f32 to vector<8x8xf32>
    %19 = arith.addf %18, %17 : vector<8x8xf32>
    %20 = arith.divf %18, %19 : vector<8x8xf32>
    %c0_12 = arith.constant 0 : index
    %c0_13 = arith.constant 0 : index
    %21 = vector.load %arg6[%c0_12, %c0_13] : memref<8x8xf32, #tpu.memory_space<vmem>>, vector<8x8xf32>
    tpu.vector_store %arg6[%c0_12, %c0_13], %20 {strides = array<i32>} : memref<8x8xf32, #tpu.memory_space<vmem>>, vector<8x8xf32>,
    return
  }
  func.func @transform_0(%arg0: i32) -> (i32, i32) {
    %c0_i32 = arith.constant 0 : i32
    %c0_i32_0 = arith.constant 0 : i32
    return %arg0, %c0_i32 : i32, i32
  }
  func.func @transform_1(%arg0: i32) -> (i32, i32) {
    %c0_i32 = arith.constant 0 : i32
    %c0_i32_0 = arith.constant 0 : i32
    %c0_i32_1 = arith.constant 0 : i32
    return %c0_i32, %c0_i32_0 : i32, i32
  }
  func.func @transform_2(%arg0: i32) -> (i32, i32) {
    %c0_i32 = arith.constant 0 : i32
    %c0_i32_0 = arith.constant 0 : i32
    %c0_i32_1 = arith.constant 0 : i32
    return %c0_i32, %c0_i32_0 : i32, i32
  }
  func.func @transform_3(%arg0: i32) -> (i32, i32) {
    %c0_i32 = arith.constant 0 : i32
    %c0_i32_0 = arith.constant 0 : i32
    %c0_i32_1 = arith.constant 0 : i32
    return %c0_i32, %c0_i32_0 : i32, i32
  }
  func.func @transform_4(%arg0: i32) -> (i32, i32) {
    %c0_i32 = arith.constant 0 : i32
    %c0_i32_0 = arith.constant 0 : i32
    %c0_i32_1 = arith.constant 0 : i32
    return %c0_i32, %c0_i32_0 : i32, i32
  }
  func.func @transform_5(%arg0: i32) -> (i32, i32) {
    %c0_i32 = arith.constant 0 : i32
    %c0_i32_0 = arith.constant 0 : i32
    return %arg0, %c0_i32 : i32, i32
  }
}

</mosaic_0001>

<llo_original>
// kernel: tpu_custom_call.1
$region0: #{tpu_custom_call.1}
  #allocation0 [shape = 'u32[]', space=smem, size = 0x4, offset = 0x4, fixed_abs, tag = 'smem constant byte address 0x4 - core index']
  #allocation1 [shape = 'u32[144,128]{1,0:T(1,128)}', space=vmem, size = 0x12000, scoped, tag = 'internal scratch']
  %s0 = inlined_call_operand.vmem [shape: f32[8,16], index: 0, kind: input, shape index: {}]
  %s1 = inlined_call_operand.vmem [shape: f32[16,32], index: 1, kind: input, shape index: {}]
  %s2 = inlined_call_operand.vmem [shape: f32[1,32], index: 2, kind: input, shape index: {}]
  %s3 = inlined_call_operand.vmem [shape: f32[32,8], index: 3, kind: input, shape index: {}]
  %s4 = inlined_call_operand.vmem [shape: f32[1,8], index: 4, kind: input, shape index: {}]
  %s5 = inlined_call_operand.hbm [shape: f32[8,8], index: 5, kind: output, shape index: {}]
  %s6 = sld [smem:[#allocation0]]
  $region30: #{tpu_custom_call.1} parent=0
    _
  %s8 = ssub.s32 1, %s6
  %s9 = scalar_select 0, %s8, %s6
  $region1: #{tpu_custom_call.1} parent=0
    #allocation2 [shape = 'u8[4096]{0}', space=vmem, size = 0x1000, scoped, tag = 'output window, operand 0, single buffered']
    #allocation3 [shape = 's32[1]{0}', space=sflag, size = 0x4, scoped, tag = 'scoped memory for tpu_custom_call.1']
    %10 = vsyncpa [#allocation3], 0
    // Predicated region
    $region2: #{tpu_custom_call.1} parent=1 // pred_check
      _
    $region3: #{tpu_custom_call.1} parent=1 // pred_check_branch
      %12 = sbr.rel (0) target = $region5
    $region4: #{tpu_custom_call.1} parent=1 // pred_region
      _
    $region5: #{tpu_custom_call.1} parent=1 // pred_fallthru
      _
    // Predicated region
    $region6: #{tpu_custom_call.1} parent=1 // pred_check
      _
    $region7: #{tpu_custom_call.1} parent=1 // pred_check_branch
      %14 = sbr.rel (0) target = $region9
    $region8: #{tpu_custom_call.1} parent=1 // pred_region
      _
    $region9: #{tpu_custom_call.1} parent=1 // pred_fallthru
      _
    // Predicated region
    $region10: #{tpu_custom_call.1} parent=1 // pred_check
      _
    $region11: #{tpu_custom_call.1} parent=1 // pred_check_branch
      %16 = sbr.rel (0) target = $region13
    $region12: #{tpu_custom_call.1} parent=1 // pred_region
      _
    $region13: #{tpu_custom_call.1} parent=1 // pred_fallthru
      _
    // Predicated region
    $region14: #{tpu_custom_call.1} parent=1 // pred_check
      _
    $region15: #{tpu_custom_call.1} parent=1 // pred_check_branch
      %18 = sbr.rel (0) target = $region17
    $region16: #{tpu_custom_call.1} parent=1 // pred_region
      _
    $region17: #{tpu_custom_call.1} parent=1 // pred_fallthru
      _
    // Predicated region
    $region18: #{tpu_custom_call.1} parent=1 // pred_check
      _
    $region19: #{tpu_custom_call.1} parent=1 // pred_check_branch
      %20 = sbr.rel (0) target = $region21
    $region20: #{tpu_custom_call.1} parent=1 // pred_region
      _
    $region21: #{tpu_custom_call.1} parent=1 // pred_fallthru
      _
    %v21 = vld [vmem:[%s0] sm:$0xff]
    %v22 = vld [vmem:[%s1] sm:$0xff]
    %v23 = vld [vmem:[%s1 + $0x8] sm:$0xff]
    %v24 = vld [vmem:[%s2] sm:$0x1]
    %v26 = vlaneseq
    %v27 = vshrl.u32 %v26, 7
    %v28 = vsub.s32 0, %v27
    %v29 = vrot.slane %v24, %v28
    %vm31 = vcmask 130048
    %v33 = vsel %vm31, %v21, 0
    %35 = vmatprep.subr.mxu0 0.0
    %36 = vmatpush1.msra.mxu0 0.0
    %37 = vmatprep.subr.mxu0 0.0
    %38 = vmatpush1.msra.mxu0 0.0
    %39 = vmatprep.subr.mxu0 0.0
    %40 = vmatpush1.msra.mxu0 0.0
    %41 = vmatprep.subr.mxu0 0.0
    %42 = vmatpush1.msra.mxu0 0.0
    %43 = vmatprep.subr.mxu0 0.0
    %44 = vmatpush1.msra.mxu0 0.0
    %45 = vmatprep.subr.mxu0 0.0
    %46 = vmatpush1.msra.mxu0 0.0
    %47 = vmatprep.subr.mxu0 0.0
    %48 = vmatpush1.msra.mxu0 0.0
    %49 = vmatprep.subr.mxu0 0.0
    %50 = vmatpush1.msra.mxu0 0.0
    %51 = vmatprep.subr.mxu0 0.0
    %52 = vmatpush1.msra.mxu0 0.0
    %53 = vmatprep.subr.mxu0 0.0
    %54 = vmatpush1.msra.mxu0 0.0
    %55 = vmatprep.subr.mxu0 0.0
    %56 = vmatpush1.msra.mxu0 0.0
    %57 = vmatprep.subr.mxu0 0.0
    %58 = vmatpush1.msra.mxu0 0.0
    %59 = vmatprep.subr.mxu0 0.0
    %60 = vmatpush1.msra.mxu0 0.0
    %61 = vmatprep.subr.mxu0 0.0
    %62 = vmatpush1.msra.mxu0 0.0
    %63 = vmatprep.subr.mxu0 0.0
    %64 = vmatpush1.msra.mxu0 %v23
    %65 = vmatprep.subr.mxu0 0.0
    %66 = vmatpush1.msra.mxu0 %v22
    %67 = vmatprep.subr.mxu0 0.0
    %68 = vmatpush2.msra.mxu0 0.0
    %69 = vmatprep.subr.mxu0 0.0
    %70 = vmatpush2.msra.mxu0 0.0
    %71 = vmatprep.subr.mxu0 0.0
    %72 = vmatpush2.msra.mxu0 0.0
    %73 = vmatprep.subr.mxu0 0.0
    %74 = vmatpush2.msra.mxu0 0.0
    %75 = vmatprep.subr.mxu0 0.0
    %76 = vmatpush2.msra.mxu0 0.0
    %77 = vmatprep.subr.mxu0 0.0
    %78 = vmatpush2.msra.mxu0 0.0
    %79 = vmatprep.subr.mxu0 0.0
    %80 = vmatpush2.msra.mxu0 0.0
    %81 = vmatprep.subr.mxu0 0.0
    %82 = vmatpush2.msra.mxu0 0.0
    %83 = vmatprep.subr.mxu0 0.0
    %84 = vmatpush2.msra.mxu0 0.0
    %85 = vmatprep.subr.mxu0 0.0
    %86 = vmatpush2.msra.mxu0 0.0
    %87 = vmatprep.subr.mxu0 0.0
    %88 = vmatpush2.msra.mxu0 0.0
    %89 = vmatprep.subr.mxu0 0.0
    %90 = vmatpush2.msra.mxu0 0.0
    %91 = vmatprep.subr.mxu0 0.0
    %92 = vmatpush2.msra.mxu0 0.0
    %93 = vmatprep.subr.mxu0 0.0
    %94 = vmatpush2.msra.mxu0 0.0
    %95 = vmatprep.subr.mxu0 0.0
    %96 = vmatpush2.msra.mxu0 0.0
    %97 = vmatprep.subr.mxu0 0.0
    %98 = vmatpush2.msra.mxu0 0.0
    %99 = vmatprep.mubr.f32.mxu0 0.0
    %100 = vmatmul.mubr.f32.gmra.mxu0 %v33
    %v101 = vpop.f32.mrf.mxu0
    %v102 = vadd.f32 %v29, %v101
    %v103 = vpop.f32.mrf.mxu0
    %104 = vdwg.mxu0
    %v105 = vxor.u32 %v102, 2147483648
    %v106 = vmul.f32 %v105, 1.442695
    %v107 = vpow.pop %v106
    %v108 = vadd.f32 %v107, 1.0
    %v109 = vrcp.pop %v108
    %v110 = vmul.f32 1.0, %v109
    %v111 = vld [vmem:[%s3] sm:$0xff]
    %v112 = vld [vmem:[%s3 + $0x8] sm:$0xff]
    %v113 = vld [vmem:[%s3 + $0x10] sm:$0xff]
    %v114 = vld [vmem:[%s3 + $0x18] sm:$0xff]
    %v115 = vld [vmem:[%s4] sm:$0x1]
    %v117 = vlaneseq
    %v118 = vshrl.u32 %v117, 7
    %v119 = vsub.s32 0, %v118
    %v120 = vrot.slane %v115, %v119
    %vm122 = vcmask 261120
    %v124 = vsel %vm122, %v110, 0
    %126 = vmatprep.subr.mxu0 0.0
    %127 = vmatpush1.msra.mxu0 0.0
    %128 = vmatprep.subr.mxu0 0.0
    %129 = vmatpush1.msra.mxu0 0.0
    %130 = vmatprep.subr.mxu0 0.0
    %131 = vmatpush1.msra.mxu0 0.0
    %132 = vmatprep.subr.mxu0 0.0
    %133 = vmatpush1.msra.mxu0 0.0
    %134 = vmatprep.subr.mxu0 0.0
    %135 = vmatpush1.msra.mxu0 0.0
    %136 = vmatprep.subr.mxu0 0.0
    %137 = vmatpush1.msra.mxu0 0.0
    %138 = vmatprep.subr.mxu0 0.0
    %139 = vmatpush1.msra.mxu0 0.0
    %140 = vmatprep.subr.mxu0 0.0
    %141 = vmatpush1.msra.mxu0 0.0
    %142 = vmatprep.subr.mxu0 0.0
    %143 = vmatpush1.msra.mxu0 0.0
    %144 = vmatprep.subr.mxu0 0.0
    %145 = vmatpush1.msra.mxu0 0.0
    %146 = vmatprep.subr.mxu0 0.0
    %147 = vmatpush1.msra.mxu0 0.0
    %148 = vmatprep.subr.mxu0 0.0
    %149 = vmatpush1.msra.mxu0 0.0
    %150 = vmatprep.subr.mxu0 0.0
    %151 = vmatpush1.msra.mxu0 %v114
    %152 = vmatprep.subr.mxu0 0.0
    %153 = vmatpush1.msra.mxu0 %v113
    %154 = vmatprep.subr.mxu0 0.0
    %155 = vmatpush1.msra.mxu0 %v112
    %156 = vmatprep.subr.mxu0 0.0
    %157 = vmatpush1.msra.mxu0 %v111
    %158 = vmatprep.subr.mxu0 0.0
    %159 = vmatpush2.msra.mxu0 0.0
    %160 = vmatprep.subr.mxu0 0.0
    %161 = vmatpush2.msra.mxu0 0.0
    %162 = vmatprep.subr.mxu0 0.0
    %163 = vmatpush2.msra.mxu0 0.0
    %164 = vmatprep.subr.mxu0 0.0
    %165 = vmatpush2.msra.mxu0 0.0
    %166 = vmatprep.subr.mxu0 0.0
    %167 = vmatpush2.msra.mxu0 0.0
    %168 = vmatprep.subr.mxu0 0.0
    %169 = vmatpush2.msra.mxu0 0.0
    %170 = vmatprep.subr.mxu0 0.0
    %171 = vmatpush2.msra.mxu0 0.0
    %172 = vmatprep.subr.mxu0 0.0
    %173 = vmatpush2.msra.mxu0 0.0
    %174 = vmatprep.subr.mxu0 0.0
    %175 = vmatpush2.msra.mxu0 0.0
    %176 = vmatprep.subr.mxu0 0.0
    %177 = vmatpush2.msra.mxu0 0.0
    %178 = vmatprep.subr.mxu0 0.0
    %179 = vmatpush2.msra.mxu0 0.0
    %180 = vmatprep.subr.mxu0 0.0
    %181 = vmatpush2.msra.mxu0 0.0
    %182 = vmatprep.subr.mxu0 0.0
    %183 = vmatpush2.msra.mxu0 0.0
    %184 = vmatprep.subr.mxu0 0.0
    %185 = vmatpush2.msra.mxu0 0.0
    %186 = vmatprep.subr.mxu0 0.0
    %187 = vmatpush2.msra.mxu0 0.0
    %188 = vmatprep.subr.mxu0 0.0
    %189 = vmatpush2.msra.mxu0 0.0
    %190 = vmatprep.mubr.f32.mxu0 0.0
    %191 = vmatmul.mubr.f32.gmra.mxu0 %v124
    %v192 = vpop.f32.mrf.mxu0
    %v193 = vadd.f32 %v120, %v192
    %v194 = vpop.f32.mrf.mxu0
    %195 = vdwg.mxu0
    %v196 = vxor.u32 %v193, 2147483648
    %v197 = vmul.f32 %v196, 1.442695
    %v198 = vpow.pop %v197
    %v199 = vadd.f32 %v198, 1.0
    %v200 = vrcp.pop %v199
    %v201 = vmul.f32 1.0, %v200
    %vm202 = vcmask 64512
    %203 = vst.msk [vmem:[#allocation2] sm:$0xff] %vm202, %v201
    // Predicated region
    $region22: #{tpu_custom_call.1} parent=1 // pred_check
      _
    $region23: #{tpu_custom_call.1} parent=1 // pred_check_branch
      %205 = sbr.rel (0) target = $region25
    $region24: #{tpu_custom_call.1} parent=1 // pred_region
      %s207 = ssub.s32 128, 128
      %208 = vsyncadd [#allocation3], %s207
      %s210 = sshll.u32 [#allocation2], 4
      %s211 = int_to_ptr.vmem [resolvable:$true] %s210
      %213 = dma.vmem_to_hbm [thread:$0]  %s211, 128, %s5, [#allocation3]
    $region25: #{tpu_custom_call.1} parent=1 // pred_fallthru
      _
    // Predicated region
    $region26: #{tpu_custom_call.1} parent=1 // pred_check
      _
    $region27: #{tpu_custom_call.1} parent=1 // pred_check_branch
      %215 = sbr.rel (0) target = $region29
    $region28: #{tpu_custom_call.1} parent=1 // pred_region
      %216 = dma.done [#allocation3], 128
    $region29: #{tpu_custom_call.1} parent=1 // pred_fallthru
      _
    %217 = vsyncpa [#allocation3], 1

// kernel: tpu_custom_call.1
$region0: #{tpu_custom_call.1}
  #allocation0 [shape = 'u32[]', space=smem, size = 0x4, offset = 0x4, fixed_abs, tag = 'smem constant byte address 0x4 - core index']
  #allocation1 [shape = 'u32[144,128]{1,0:T(1,128)}', space=vmem, size = 0x12000, scoped, tag = 'internal scratch']
  %s0 = inlined_call_operand.vmem [shape: f32[8,16], index: 0, kind: input, shape index: {}]
  %s1 = inlined_call_operand.vmem [shape: f32[16,32], index: 1, kind: input, shape index: {}]
  %s2 = inlined_call_operand.vmem [shape: f32[1,32], index: 2, kind: input, shape index: {}]
  %s3 = inlined_call_operand.vmem [shape: f32[32,8], index: 3, kind: input, shape index: {}]
  %s4 = inlined_call_operand.vmem [shape: f32[1,8], index: 4, kind: input, shape index: {}]
  %s5 = inlined_call_operand.hbm [shape: f32[8,8], index: 5, kind: output, shape index: {}]
  %s6 = sld [smem:[#allocation0]]
  $region30: #{tpu_custom_call.1} parent=0
    _
  %s8 = ssub.s32 1, %s6
  %s9 = scalar_select 0, %s8, %s6
  $region1: #{tpu_custom_call.1} parent=0
    #allocation2 [shape = 'u8[4096]{0}', space=vmem, size = 0x1000, scoped, tag = 'output window, operand 0, single buffered']
    #allocation3 [shape = 's32[1]{0}', space=sflag, size = 0x4, scoped, tag = 'scoped memory for tpu_custom_call.1']
    %10 = vsyncpa [#allocation3], 0
    // Predicated region
    $region2: #{tpu_custom_call.1} parent=1 // pred_check
      _
    $region3: #{tpu_custom_call.1} parent=1 // pred_check_branch
      %12 = sbr.rel (0) target = $region5
    $region4: #{tpu_custom_call.1} parent=1 // pred_region
      _
    $region5: #{tpu_custom_call.1} parent=1 // pred_fallthru
      _
    // Predicated region
    $region6: #{tpu_custom_call.1} parent=1 // pred_check
      _
    $region7: #{tpu_custom_call.1} parent=1 // pred_check_branch
      %14 = sbr.rel (0) target = $region9
    $region8: #{tpu_custom_call.1} parent=1 // pred_region
      _
    $region9: #{tpu_custom_call.1} parent=1 // pred_fallthru
      _
    // Predicated region
    $region10: #{tpu_custom_call.1} parent=1 // pred_check
      _
    $region11: #{tpu_custom_call.1} parent=1 // pred_check_branch
      %16 = sbr.rel (0) target = $region13
    $region12: #{tpu_custom_call.1} parent=1 // pred_region
      _
    $region13: #{tpu_custom_call.1} parent=1 // pred_fallthru
      _
    // Predicated region
    $region14: #{tpu_custom_call.1} parent=1 // pred_check
      _
    $region15: #{tpu_custom_call.1} parent=1 // pred_check_branch
      %18 = sbr.rel (0) target = $region17
    $region16: #{tpu_custom_call.1} parent=1 // pred_region
      _
    $region17: #{tpu_custom_call.1} parent=1 // pred_fallthru
      _
    // Predicated region
    $region18: #{tpu_custom_call.1} parent=1 // pred_check
      _
    $region19: #{tpu_custom_call.1} parent=1 // pred_check_branch
      %20 = sbr.rel (0) target = $region21
    $region20: #{tpu_custom_call.1} parent=1 // pred_region
      _
    $region21: #{tpu_custom_call.1} parent=1 // pred_fallthru
      _
    %v21 = vld [vmem:[%s0] sm:$0xff]
    %v22 = vld [vmem:[%s1] sm:$0xff]
    %v23 = vld [vmem:[%s1 + $0x8] sm:$0xff]
    %v24 = vld [vmem:[%s2] sm:$0x1]
    %v26 = vlaneseq
    %v27 = vshrl.u32 %v26, 7
    %v28 = vsub.s32 0, %v27
    %v29 = vrot.slane %v24, %v28
    %vm31 = vcmask 130048
    %v33 = vsel %vm31, %v21, 0
    %35 = vmatprep.subr.mxu0 0.0
    %36 = vmatpush1.msra.mxu0 0.0
    %37 = vmatprep.subr.mxu0 0.0
    %38 = vmatpush1.msra.mxu0 0.0
    %39 = vmatprep.subr.mxu0 0.0
    %40 = vmatpush1.msra.mxu0 0.0
    %41 = vmatprep.subr.mxu0 0.0
    %42 = vmatpush1.msra.mxu0 0.0
    %43 = vmatprep.subr.mxu0 0.0
    %44 = vmatpush1.msra.mxu0 0.0
    %45 = vmatprep.subr.mxu0 0.0
    %46 = vmatpush1.msra.mxu0 0.0
    %47 = vmatprep.subr.mxu0 0.0
    %48 = vmatpush1.msra.mxu0 0.0
    %49 = vmatprep.subr.mxu0 0.0
    %50 = vmatpush1.msra.mxu0 0.0
    %51 = vmatprep.subr.mxu0 0.0
    %52 = vmatpush1.msra.mxu0 0.0
    %53 = vmatprep.subr.mxu0 0.0
    %54 = vmatpush1.msra.mxu0 0.0
    %55 = vmatprep.subr.mxu0 0.0
    %56 = vmatpush1.msra.mxu0 0.0
    %57 = vmatprep.subr.mxu0 0.0
    %58 = vmatpush1.msra.mxu0 0.0
    %59 = vmatprep.subr.mxu0 0.0
    %60 = vmatpush1.msra.mxu0 0.0
    %61 = vmatprep.subr.mxu0 0.0
    %62 = vmatpush1.msra.mxu0 0.0
    %63 = vmatprep.subr.mxu0 0.0
    %64 = vmatpush1.msra.mxu0 %v23
    %65 = vmatprep.subr.mxu0 0.0
    %66 = vmatpush1.msra.mxu0 %v22
    %67 = vmatprep.subr.mxu0 0.0
    %68 = vmatpush2.msra.mxu0 0.0
    %69 = vmatprep.subr.mxu0 0.0
    %70 = vmatpush2.msra.mxu0 0.0
    %71 = vmatprep.subr.mxu0 0.0
    %72 = vmatpush2.msra.mxu0 0.0
    %73 = vmatprep.subr.mxu0 0.0
    %74 = vmatpush2.msra.mxu0 0.0
    %75 = vmatprep.subr.mxu0 0.0
    %76 = vmatpush2.msra.mxu0 0.0
    %77 = vmatprep.subr.mxu0 0.0
    %78 = vmatpush2.msra.mxu0 0.0
    %79 = vmatprep.subr.mxu0 0.0
    %80 = vmatpush2.msra.mxu0 0.0
    %81 = vmatprep.subr.mxu0 0.0
    %82 = vmatpush2.msra.mxu0 0.0
    %83 = vmatprep.subr.mxu0 0.0
    %84 = vmatpush2.msra.mxu0 0.0
    %85 = vmatprep.subr.mxu0 0.0
    %86 = vmatpush2.msra.mxu0 0.0
    %87 = vmatprep.subr.mxu0 0.0
    %88 = vmatpush2.msra.mxu0 0.0
    %89 = vmatprep.subr.mxu0 0.0
    %90 = vmatpush2.msra.mxu0 0.0
    %91 = vmatprep.subr.mxu0 0.0
    %92 = vmatpush2.msra.mxu0 0.0
    %93 = vmatprep.subr.mxu0 0.0
    %94 = vmatpush2.msra.mxu0 0.0
    %95 = vmatprep.subr.mxu0 0.0
    %96 = vmatpush2.msra.mxu0 0.0
    %97 = vmatprep.subr.mxu0 0.0
    %98 = vmatpush2.msra.mxu0 0.0
    %99 = vmatprep.mubr.f32.mxu0 0.0
    %100 = vmatmul.mubr.f32.gmra.mxu0 %v33
    %v101 = vpop.f32.mrf.mxu0
    %v102 = vadd.f32 %v29, %v101
    %v103 = vpop.f32.mrf.mxu0
    %104 = vdwg.mxu0
    %v105 = vxor.u32 %v102, 2147483648
    %v106 = vmul.f32 %v105, 1.442695
    %v107 = vpow.pop %v106
    %v108 = vadd.f32 %v107, 1.0
    %v109 = vrcp.pop %v108
    %v110 = vmul.f32 1.0, %v109
    %v111 = vld [vmem:[%s3] sm:$0xff]
    %v112 = vld [vmem:[%s3 + $0x8] sm:$0xff]
    %v113 = vld [vmem:[%s3 + $0x10] sm:$0xff]
    %v114 = vld [vmem:[%s3 + $0x18] sm:$0xff]
    %v115 = vld [vmem:[%s4] sm:$0x1]
    %v117 = vlaneseq
    %v118 = vshrl.u32 %v117, 7
    %v119 = vsub.s32 0, %v118
    %v120 = vrot.slane %v115, %v119
    %vm122 = vcmask 261120
    %v124 = vsel %vm122, %v110, 0
    %126 = vmatprep.subr.mxu0 0.0
    %127 = vmatpush1.msra.mxu0 0.0
    %128 = vmatprep.subr.mxu0 0.0
    %129 = vmatpush1.msra.mxu0 0.0
    %130 = vmatprep.subr.mxu0 0.0
    %131 = vmatpush1.msra.mxu0 0.0
    %132 = vmatprep.subr.mxu0 0.0
    %133 = vmatpush1.msra.mxu0 0.0
    %134 = vmatprep.subr.mxu0 0.0
    %135 = vmatpush1.msra.mxu0 0.0
    %136 = vmatprep.subr.mxu0 0.0
    %137 = vmatpush1.msra.mxu0 0.0
    %138 = vmatprep.subr.mxu0 0.0
    %139 = vmatpush1.msra.mxu0 0.0
    %140 = vmatprep.subr.mxu0 0.0
    %141 = vmatpush1.msra.mxu0 0.0
    %142 = vmatprep.subr.mxu0 0.0
    %143 = vmatpush1.msra.mxu0 0.0
    %144 = vmatprep.subr.mxu0 0.0
    %145 = vmatpush1.msra.mxu0 0.0
    %146 = vmatprep.subr.mxu0 0.0
    %147 = vmatpush1.msra.mxu0 0.0
    %148 = vmatprep.subr.mxu0 0.0
    %149 = vmatpush1.msra.mxu0 0.0
    %150 = vmatprep.subr.mxu0 0.0
    %151 = vmatpush1.msra.mxu0 %v114
    %152 = vmatprep.subr.mxu0 0.0
    %153 = vmatpush1.msra.mxu0 %v113
    %154 = vmatprep.subr.mxu0 0.0
    %155 = vmatpush1.msra.mxu0 %v112
    %156 = vmatprep.subr.mxu0 0.0
    %157 = vmatpush1.msra.mxu0 %v111
    %158 = vmatprep.subr.mxu0 0.0
    %159 = vmatpush2.msra.mxu0 0.0
    %160 = vmatprep.subr.mxu0 0.0
    %161 = vmatpush2.msra.mxu0 0.0
    %162 = vmatprep.subr.mxu0 0.0
    %163 = vmatpush2.msra.mxu0 0.0
    %164 = vmatprep.subr.mxu0 0.0
    %165 = vmatpush2.msra.mxu0 0.0
    %166 = vmatprep.subr.mxu0 0.0
    %167 = vmatpush2.msra.mxu0 0.0
    %168 = vmatprep.subr.mxu0 0.0
    %169 = vmatpush2.msra.mxu0 0.0
    %170 = vmatprep.subr.mxu0 0.0
    %171 = vmatpush2.msra.mxu0 0.0
    %172 = vmatprep.subr.mxu0 0.0
    %173 = vmatpush2.msra.mxu0 0.0
    %174 = vmatprep.subr.mxu0 0.0
    %175 = vmatpush2.msra.mxu0 0.0
    %176 = vmatprep.subr.mxu0 0.0
    %177 = vmatpush2.msra.mxu0 0.0
    %178 = vmatprep.subr.mxu0 0.0
    %179 = vmatpush2.msra.mxu0 0.0
    %180 = vmatprep.subr.mxu0 0.0
    %181 = vmatpush2.msra.mxu0 0.0
    %182 = vmatprep.subr.mxu0 0.0
    %183 = vmatpush2.msra.mxu0 0.0
    %184 = vmatprep.subr.mxu0 0.0
    %185 = vmatpush2.msra.mxu0 0.0
    %186 = vmatprep.subr.mxu0 0.0
    %187 = vmatpush2.msra.mxu0 0.0
    %188 = vmatprep.subr.mxu0 0.0
    %189 = vmatpush2.msra.mxu0 0.0
    %190 = vmatprep.mubr.f32.mxu0 0.0
    %191 = vmatmul.mubr.f32.gmra.mxu0 %v124
    %v192 = vpop.f32.mrf.mxu0
    %v193 = vadd.f32 %v120, %v192
    %v194 = vpop.f32.mrf.mxu0
    %195 = vdwg.mxu0
    %v196 = vxor.u32 %v193, 2147483648
    %v197 = vmul.f32 %v196, 1.442695
    %v198 = vpow.pop %v197
    %v199 = vadd.f32 %v198, 1.0
    %v200 = vrcp.pop %v199
    %v201 = vmul.f32 1.0, %v200
    %vm202 = vcmask 64512
    %203 = vst.msk [vmem:[#allocation2] sm:$0xff] %vm202, %v201
    // Predicated region
    $region22: #{tpu_custom_call.1} parent=1 // pred_check
      _
    $region23: #{tpu_custom_call.1} parent=1 // pred_check_branch
      %205 = sbr.rel (0) target = $region25
    $region24: #{tpu_custom_call.1} parent=1 // pred_region
      %s207 = ssub.s32 128, 128
      %208 = vsyncadd [#allocation3], %s207
      %s210 = sshll.u32 [#allocation2], 4
      %s211 = int_to_ptr.vmem [resolvable:$true] %s210
      %213 = dma.vmem_to_hbm [thread:$0]  %s211, 128, %s5, [#allocation3]
    $region25: #{tpu_custom_call.1} parent=1 // pred_fallthru
      _
    // Predicated region
    $region26: #{tpu_custom_call.1} parent=1 // pred_check
      _
    $region27: #{tpu_custom_call.1} parent=1 // pred_check_branch
      %215 = sbr.rel (0) target = $region29
    $region28: #{tpu_custom_call.1} parent=1 // pred_region
      %216 = dma.done [#allocation3], 128
    $region29: #{tpu_custom_call.1} parent=1 // pred_fallthru
      _
    %217 = vsyncpa [#allocation3], 1

</llo_original>
